<compile_context>
chip_gen: v5e
topology: v5e:2x2
jax: 0.10.0
libtpu: 0.0.40
codegen_flags: <defaults>
</compile_context>

<pallas_src>
import functools

import jax
import jax.numpy as jnp
from jax import lax
from jax.experimental import pallas as pl
from jax.experimental.pallas import tpu as pltpu

LANE = 128
SUBLANE = 8
EPS = 1e-8


def _hw_config():
    """Returns (num_cores, target per-input block bytes, vmem limit cap)."""
    kind = ""
    try:
        kind = (jax.devices()[0].device_kind or "").lower()
    except Exception:  # non-TPU / query failure -> safe defaults
        pass
    if "v7" in kind or "7x" in kind:
        # 2 TensorCores, ~3.2 TB/s HBM, but only 64 MiB VMEM -> 4 MiB blocks.
        return 2, 4 << 20, 48 << 20
    if "v6" in kind:
        # Single TC, 128 MiB VMEM -> large blocks are cheap.
        return 1, 4 << 20, 96 << 20
    if "v5p" in kind or "v4" in kind:
        # Megacore chips: 2 TCs, plenty of VMEM.
        return 2, 4 << 20, 64 << 20
    if "v5" in kind:
        # v5e: single TC, ~0.8 TB/s HBM; 2 MiB blocks are near roofline.
        return 1, 2 << 20, 48 << 20
    # Unknown backend: conservative.
    return 1, 2 << 20, 32 << 20


def _edge_loss_kernel(p_ref, e_ref, d_ref, out_ref, *, alpha, valid_rows,
                      tile_rows, tiles_per_core, n_tiles, need_mask,
                      has_replay):
    c = pl.program_id(0)   # core / parallel axis
    t = pl.program_id(1)   # reduction axis (tiles handled by this core)

    @pl.when(t == 0)
    def _():
        out_ref[...] = jnp.zeros_like(out_ref)

    tile_idx = c * tiles_per_core + t

    def compute():
        p = p_ref[...].astype(jnp.float32)
        e = e_ref[...].astype(jnp.float32)
        d = d_ref[...].astype(jnp.float32)

        if need_mask:
            # Only compiled when the last block is partial: its out-of-bounds
            # rows may contain garbage, so sanitize them (p->0.5, e=d->0 makes
            # the contribution exactly zero and log() never sees junk).
            row_ids = tile_idx * tile_rows + lax.broadcasted_iota(
                jnp.int32, (tile_rows, LANE), 0)
            mask = row_ids < valid_rows
            p = jnp.where(mask, p, 0.5)
            e = jnp.where(mask, e, 0.0)
            d = jnp.where(mask, d, 0.0)

        loss = (-alpha * e * jnp.log(p + EPS)
                - (1.0 - alpha) * d * (1.0 - e) * jnp.log(1.0 - p + EPS))

        # Vreg-wise partial reduction (pure VPU adds into the resident output
        # block).  Final cross-lane reduce + mean division happen in wrapper.
        out_ref[...] += loss.reshape(tile_rows // SUBLANE, SUBLANE,
                                     LANE).sum(axis=0)

    if has_replay:
        # Clamped replay tiles (ragged tile count across cores) skip compute;
        # their DMA is dedup'd because the clamped block index repeats.
        pl.when(tile_idx < n_tiles)(compute)
    else:
        compute()


def edge_loss(prediction_edge, edge, dis_map, *, alpha=0.5,
              reduction="elementwise_mean", rows_per_tile=None,
              num_cores=None):
    """Pallas TPU implementation of EdgeLoss.forward for mean/sum reductions."""
    assert prediction_edge.shape == edge.shape == dis_map.shape
    assert reduction in ("elementwise_mean", "sum")
    # TODO(synk): reduction='none' (per-element loss tensor output) not implemented.

    n_elems = prediction_edge.size
    itemsizes = [jnp.dtype(x.dtype).itemsize
                 for x in (prediction_edge, edge, dis_map)]
    # Sublane alignment of the second-minor dim: 8 rows for 32-bit, 16 for
    # bf16/f16, 32 for int8/bool (packed-sublane min tiles).
    row_align = max(max(SUBLANE, 32 // s) for s in itemsizes)

    cfg_cores, target_block_bytes, vmem_cap = _hw_config()
    if num_cores is None:
        num_cores = cfg_cores
    num_cores = int(num_cores)

    def to_slab(x):
        flat = jnp.ravel(x)  # native dtype kept in HBM; row-major ravel is free
        rows = -(-flat.size // LANE)
        rows = max(row_align, -(-rows // row_align) * row_align)
        pad = rows * LANE - flat.size
        if pad:
            # Zero padding is loss-neutral: e = d = 0 kills both terms and
            # log(0 + 1e-8) / log(1 + 1e-8) are finite.  Do NOT change the
            # pad value without also changing valid_rows / masking.
            flat = jnp.pad(flat, (0, pad))
        return flat.reshape(rows, LANE)

    p2 = to_slab(prediction_edge)
    e2 = to_slab(edge)
    d2 = to_slab(dis_map)
    arr_rows = p2.shape[0]

    # Generation/dtype-aware tile: ~target_block_bytes per input block.
    if rows_per_tile is None:
        rows_per_tile = max(row_align,
                            target_block_bytes // (LANE * max(itemsizes)))
    tile_rows = min(int(rows_per_tile), arr_rows)
    tile_rows = max(row_align, (tile_rows // row_align) * row_align)

    n_tiles = -(-arr_rows // tile_rows)
    tiles_per_core = -(-n_tiles // num_cores)
    grid = (num_cores, tiles_per_core)

    need_mask = (arr_rows % tile_rows) != 0          # partial last block
    has_replay = n_tiles != num_cores * tiles_per_core  # ragged tile count

    def in_index_map(c, t):
        # Clamp so the pipeline DMA never walks past the last real block; any
        # replayed logical tiles skip compute inside the kernel.
        return (jnp.minimum(c * tiles_per_core + t, n_tiles - 1), 0)

    in_spec = pl.BlockSpec((tile_rows, LANE), in_index_map)
    out_spec = pl.BlockSpec((SUBLANE, LANE), lambda c, t: (c, 0))

    kernel = functools.partial(
        _edge_loss_kernel, alpha=float(alpha), valid_rows=int(arr_rows),
        tile_rows=int(tile_rows), tiles_per_core=int(tiles_per_core),
        n_tiles=int(n_tiles), need_mask=bool(need_mask),
        has_replay=bool(has_replay))

    # Explicit scoped-VMEM limit derived from the real double-buffered footprint.
    block_in_bytes = sum(tile_rows * LANE * s for s in itemsizes)
    out_bytes = num_cores * SUBLANE * LANE * 4
    vmem_limit = int(min(max(2 * block_in_bytes + out_bytes + (2 << 20),
                             16 << 20), vmem_cap))

    cost = pl.CostEstimate(
        flops=10 * int(n_elems),
        transcendentals=2 * int(n_elems),
        bytes_accessed=int(p2.nbytes + e2.nbytes + d2.nbytes) + out_bytes)

    partials = pl.pallas_call(
        kernel,
        out_shape=jax.ShapeDtypeStruct((num_cores * SUBLANE, LANE),
                                       jnp.float32),
        grid_spec=pltpu.PrefetchScalarGridSpec(
            num_scalar_prefetch=0,
            grid=grid,
            in_specs=[in_spec, in_spec, in_spec],
            out_specs=out_spec,
        ),
        compiler_params=pltpu.CompilerParams(
            dimension_semantics=("parallel", "arbitrary"),
            vmem_limit_bytes=vmem_limit),
        cost_estimate=cost,
    )(p2, e2, d2)

    total = jnp.sum(partials)
    if reduction == "elementwise_mean":
        total = total / jnp.float32(n_elems)
    return total


def edge_loss_ref(prediction_edge, edge, dis_map, *, alpha=0.5,
                  reduction="elementwise_mean"):
    p = prediction_edge.astype(jnp.float32)
    e = edge.astype(jnp.float32)
    d = dis_map.astype(jnp.float32)
    loss = (-alpha * e * jnp.log(p + EPS)
            - (1.0 - alpha) * d * (1.0 - e) * jnp.log(1.0 - p + EPS))
    if reduction == "elementwise_mean":
        return jnp.mean(loss)
    return jnp.sum(loss)


def _make_inputs(key, shape, pred_dtype=jnp.float32, edge_dtype=None,
                 dis_dtype=None):
    edge_dtype = pred_dtype if edge_dtype is None else edge_dtype
    dis_dtype = pred_dtype if dis_dtype is None else dis_dtype
    k1, k2, k3 = jax.random.split(key, 3)
    pred = jax.random.uniform(k1, shape, jnp.float32,
                              minval=0.01, maxval=0.99).astype(pred_dtype)
    edge = (jax.random.uniform(k2, shape, jnp.float32) > 0.5).astype(edge_dtype)
    dis = jax.random.uniform(k3, shape, jnp.float32).astype(dis_dtype)
    return pred, edge, dis


if __name__ == "__main__":
    key = jax.random.PRNGKey(0)
    k_main, k_odd, k_mask, k_bf16 = jax.random.split(key, 4)

    # Main case: NCHW (B, C, H, W), size a clean multiple of 128 (fast path).
    B, C, H, W = 2, 4, 16, 16
    pred, edge, dis = _make_inputs(k_main, (B, C, H, W))

    out = jax.block_until_ready(
        edge_loss(pred, edge, dis, alpha=0.5, reduction="elementwise_mean"))
    ref = edge_loss_ref(pred, edge, dis, alpha=0.5,
                        reduction="elementwise_mean")
    assert jnp.allclose(out, ref, rtol=1e-5, atol=1e-6), (out, ref)

    out_sum = jax.block_until_ready(
        edge_loss(pred, edge, dis, reduction="sum"))
    ref_sum = edge_loss_ref(pred, edge, dis, reduction="sum")
    assert jnp.allclose(out_sum, ref_sum, rtol=2e-5, atol=1e-3), (out_sum,
                                                                  ref_sum)

    # Ragged case: size not a multiple of 128 -> zero tail pad (loss-neutral).
    pred_o, edge_o, dis_o = _make_inputs(k_odd, (3, 5, 7, 11))
    out_o = jax.block_until_ready(edge_loss(pred_o, edge_o, dis_o))
    ref_o = edge_loss_ref(pred_o, edge_o, dis_o)
    assert jnp.allclose(out_o, ref_o, rtol=1e-5, atol=1e-6), (out_o, ref_o)

    # Masked path: partial last block (rows % tile_rows != 0).
    pred_m, edge_m, dis_m = _make_inputs(k_mask, (1, 3, 32, 128))
    out_m = jax.block_until_ready(
        edge_loss(pred_m, edge_m, dis_m, reduction="sum",
                  rows_per_tile=64, num_cores=1))
    ref_m = edge_loss_ref(pred_m, edge_m, dis_m, reduction="sum")
    assert jnp.allclose(out_m, ref_m, rtol=2e-5, atol=1e-3), (out_m, ref_m)

    # Replay path: odd tile count across a forced two-core parallel axis.
    out_r = jax.block_until_ready(
        edge_loss(pred_m, edge_m, dis_m, reduction="sum",
                  rows_per_tile=32, num_cores=2))
    assert jnp.allclose(out_r, ref_m, rtol=2e-5, atol=1e-3), (out_r, ref_m)

    # Narrow dtypes: bf16 pred/dis + int8 edge stay narrow in HBM (5 B/elem);
    # the f32 upcast happens inside the kernel.
    pred_b, edge_b, dis_b = _make_inputs(k_bf16, (B, C, H, W),
                                         pred_dtype=jnp.bfloat16,
                                         edge_dtype=jnp.int8,
                                         dis_dtype=jnp.bfloat16)
    out_b = jax.block_until_ready(edge_loss(pred_b, edge_b, dis_b))
    ref_b = edge_loss_ref(pred_b, edge_b, dis_b)
    assert jnp.allclose(out_b, ref_b, rtol=1e-4, atol=1e-5), (out_b, ref_b)

    print("KERNEL_OK")
</pallas_src>

<mosaic_0001>
module attributes {stable_mosaic.version = 11 : i64} {
  func.func @_edge_loss_kernel(%arg0: i32, %arg1: i32, %arg2: memref<16x128xf32, #tpu.memory_space<vmem>>, %arg3: memref<16x128xf32, #tpu.memory_space<vmem>>, %arg4: memref<16x128xf32, #tpu.memory_space<vmem>>, %arg5: memref<8x128xf32, #tpu.memory_space<vmem>>) attributes {dimension_semantics = [#tpu.dimension_semantics<parallel>, #tpu.dimension_semantics<arbitrary>], iteration_bounds = array<i64: 1, 1>, scalar_prefetch = 0 : i64, scratch_operands = 0 : i64, tpu.core_type = #tpu.core_type<tc>, window_params = [{transform_indices = @transform_0, window_bounds = array<i64: 16, 128>}, {transform_indices = @transform_1, window_bounds = array<i64: 16, 128>}, {transform_indices = @transform_2, window_bounds = array<i64: 16, 128>}, {transform_indices = @transform_3, window_bounds = array<i64: 8, 128>}]} {
    %c0_i32 = arith.constant 0 : i32
    %0 = arith.cmpi eq, %arg1, %c0_i32 : i32
    %1 = arith.extui %0 : i1 to i32
    %c0_i32_0 = arith.constant 0 : i32
    %2 = arith.cmpi ne, %1, %c0_i32_0 : i32
    scf.if %2 {
      %cst_16 = arith.constant 0.000000e+00 : f32
      %29 = vector.broadcast %cst_16 : f32 to vector<8x128xf32>
      %c0_17 = arith.constant 0 : index
      %c0_18 = arith.constant 0 : index
      %30 = vector.load %arg5[%c0_17, %c0_18] : memref<8x128xf32, #tpu.memory_space<vmem>>, vector<8x128xf32>
      tpu.vector_store %arg5[%c0_17, %c0_18], %29 {strides = array<i32>} : memref<8x128xf32, #tpu.memory_space<vmem>>, vector<8x128xf32>,
    } else {
    }
    %c0 = arith.constant 0 : index
    %c0_1 = arith.constant 0 : index
    %3 = vector.load %arg2[%c0, %c0_1] : memref<16x128xf32, #tpu.memory_space<vmem>>, vector<16x128xf32>
    %c0_2 = arith.constant 0 : index
    %c0_3 = arith.constant 0 : index
    %4 = vector.load %arg3[%c0_2, %c0_3] : memref<16x128xf32, #tpu.memory_space<vmem>>, vector<16x128xf32>
    %c0_4 = arith.constant 0 : index
    %c0_5 = arith.constant 0 : index
    %5 = vector.load %arg4[%c0_4, %c0_5] : memref<16x128xf32, #tpu.memory_space<vmem>>, vector<16x128xf32>
    %cst = arith.constant -5.000000e-01 : f32
    %6 = vector.broadcast %cst : f32 to vector<16x128xf32>
    %7 = arith.mulf %6, %4 : vector<16x128xf32>
    %cst_6 = arith.constant 9.99999993E-9 : f32
    %8 = vector.broadcast %cst_6 : f32 to vector<16x128xf32>
    %9 = arith.addf %3, %8 : vector<16x128xf32>
    %10 = math.log %9 : vector<16x128xf32>
    %11 = arith.mulf %7, %10 : vector<16x128xf32>
    %cst_7 = arith.constant 5.000000e-01 : f32
    %12 = vector.broadcast %cst_7 : f32 to vector<16x128xf32>
    %13 = arith.mulf %12, %5 : vector<16x128xf32>
    %cst_8 = arith.constant 1.000000e+00 : f32
    %14 = vector.broadcast %cst_8 : f32 to vector<16x128xf32>
    %15 = arith.subf %14, %4 : vector<16x128xf32>
    %16 = arith.mulf %13, %15 : vector<16x128xf32>
    %cst_9 = arith.constant 1.000000e+00 : f32
    %17 = vector.broadcast %cst_9 : f32 to vector<16x128xf32>
    %18 = arith.subf %17, %3 : vector<16x128xf32>
    %cst_10 = arith.constant 9.99999993E-9 : f32
    %19 = vector.broadcast %cst_10 : f32 to vector<16x128xf32>
    %20 = arith.addf %18, %19 : vector<16x128xf32>
    %21 = math.log %20 : vector<16x128xf32>
    %22 = arith.mulf %16, %21 : vector<16x128xf32>
    %23 = arith.subf %11, %22 : vector<16x128xf32>
    %c0_11 = arith.constant 0 : index
    %c0_12 = arith.constant 0 : index
    %24 = vector.load %arg5[%c0_11, %c0_12] : memref<8x128xf32, #tpu.memory_space<vmem>>, vector<8x128xf32>
    %25 = vector.shape_cast %23 : vector<16x128xf32> to vector<2x8x128xf32>
    %cst_13 = arith.constant dense<0.000000e+00> : vector<8x128xf32>
    %26 = vector.multi_reduction <add>, %25, %cst_13 [0] : vector<2x8x128xf32> to vector<8x128xf32>
    %27 = arith.addf %24, %26 : vector<8x128xf32>
    %c0_14 = arith.constant 0 : index
    %c0_15 = arith.constant 0 : index
    %28 = vector.load %arg5[%c0_14, %c0_15] : memref<8x128xf32, #tpu.memory_space<vmem>>, vector<8x128xf32>
    tpu.vector_store %arg5[%c0_14, %c0_15], %27 {strides = array<i32>} : memref<8x128xf32, #tpu.memory_space<vmem>>, vector<8x128xf32>,
    return
  }
  func.func @transform_0(%arg0: i32, %arg1: i32) -> (i32, i32) {
    %c1_i32 = arith.constant 1 : i32
    %0 = arith.muli %arg0, %c1_i32 : i32
    %1 = arith.addi %0, %arg1 : i32
    %c0_i32 = arith.constant 0 : i32
    %2 = arith.minsi %1, %c0_i32 : i32
    %c0_i32_0 = arith.constant 0 : i32
    %c0_i32_1 = arith.constant 0 : i32
    return %2, %c0_i32_0 : i32, i32
  }
  func.func @transform_1(%arg0: i32, %arg1: i32) -> (i32, i32) {
    %c1_i32 = arith.constant 1 : i32
    %0 = arith.muli %arg0, %c1_i32 : i32
    %1 = arith.addi %0, %arg1 : i32
    %c0_i32 = arith.constant 0 : i32
    %2 = arith.minsi %1, %c0_i32 : i32
    %c0_i32_0 = arith.constant 0 : i32
    %c0_i32_1 = arith.constant 0 : i32
    return %2, %c0_i32_0 : i32, i32
  }
  func.func @transform_2(%arg0: i32, %arg1: i32) -> (i32, i32) {
    %c1_i32 = arith.constant 1 : i32
    %0 = arith.muli %arg0, %c1_i32 : i32
    %1 = arith.addi %0, %arg1 : i32
    %c0_i32 = arith.constant 0 : i32
    %2 = arith.minsi %1, %c0_i32 : i32
    %c0_i32_0 = arith.constant 0 : i32
    %c0_i32_1 = arith.constant 0 : i32
    return %2, %c0_i32_0 : i32, i32
  }
  func.func @transform_3(%arg0: i32, %arg1: i32) -> (i32, i32) {
    %c0_i32 = arith.constant 0 : i32
    %c0_i32_0 = arith.constant 0 : i32
    return %arg0, %c0_i32 : i32, i32
  }
}

</mosaic_0001>

<llo_original>
// kernel: tpu_custom_call.1
$region0: #{tpu_custom_call.1}
  #allocation0 [shape = 'u32[]', space=smem, size = 0x4, offset = 0x4, fixed_abs, tag = 'smem constant byte address 0x4 - core index']
  #allocation1 [shape = 'u32[72,128]{1,0:T(1,128)}', space=vmem, size = 0x9000, scoped, tag = 'internal scratch']
  %s0 = inlined_call_operand.hbm [shape: f32[16,128], index: 0, kind: input, shape index: {}]
  %s1 = inlined_call_operand.hbm [shape: f32[16,128], index: 1, kind: input, shape index: {}]
  %s2 = inlined_call_operand.hbm [shape: f32[16,128], index: 2, kind: input, shape index: {}]
  %s3 = inlined_call_operand.hbm [shape: f32[8,128], index: 3, kind: output, shape index: {}]
  %s4 = sld [smem:[#allocation0]]
  $region38: #{tpu_custom_call.1} parent=0
    _
  %s6 = ssub.s32 1, %s4
  %s7 = scalar_select 0, %s6, %s4
  $region1: #{tpu_custom_call.1} parent=0
    #allocation2 [shape = 'u8[8192]{0}', space=vmem, size = 0x2000, scoped, tag = 'input window, operand 0, single buffered']
    #allocation3 [shape = 's32[1]{0}', space=sflag, size = 0x4, scoped, tag = 'scoped memory for tpu_custom_call.1']
    #allocation4 [shape = 's32[1]{0}', space=sflag, size = 0x4, scoped, tag = 'scoped memory for tpu_custom_call.1']
    #allocation5 [shape = 'u8[8192]{0}', space=vmem, size = 0x2000, scoped, tag = 'input window, operand 1, single buffered']
    #allocation6 [shape = 's32[1]{0}', space=sflag, size = 0x4, scoped, tag = 'scoped memory for tpu_custom_call.1']
    #allocation7 [shape = 'u8[8192]{0}', space=vmem, size = 0x2000, scoped, tag = 'input window, operand 2, single buffered']
    #allocation8 [shape = 'u8[4096]{0}', space=vmem, size = 0x1000, scoped, tag = 'output window, operand 0, single buffered']
    %8 = vsyncpa [#allocation3], 0
    %9 = vsyncpa [#allocation6], 0
    %10 = vsyncpa [#allocation4], 0
    // Predicated region
    $region2: #{tpu_custom_call.1} parent=1 // pred_check
      _
    $region3: #{tpu_custom_call.1} parent=1 // pred_check_branch
      %12 = sbr.rel (0) target = $region5
    $region4: #{tpu_custom_call.1} parent=1 // pred_region
      %s13 = sadd.s32 0, 0
      %p14 = scmp.lt.s32.totalorder %s13, 0
      %s15 = scalar_select %p14, %s13, 0
      %s16 = smul.u32 2, %s15
      %18 = vsyncadd [#allocation3], 0
      %s19 = smul.addr %s16, 8
      %s20 = scalar_lea.hbm %s0, %s19
      %s21 = sshll.u32 %s20, 4
      %s22 = int_to_ptr.hbm [resolvable:$true] %s21
      %s23 = sshll.u32 [#allocation2], 4
      %s24 = int_to_ptr.vmem [resolvable:$true] %s23
      %29 = dma.hbm_to_vmem [thread:$0]  %s22, 256, %s24, [#allocation3], 128, 128, 8
    $region5: #{tpu_custom_call.1} parent=1 // pred_fallthru
      _
    // Predicated region
    $region6: #{tpu_custom_call.1} parent=1 // pred_check
      _
    $region7: #{tpu_custom_call.1} parent=1 // pred_check_branch
      %31 = sbr.rel (0) target = $region9
    $region8: #{tpu_custom_call.1} parent=1 // pred_region
      %s32 = sadd.s32 0, 0
      %p33 = scmp.lt.s32.totalorder %s32, 0
      %s34 = scalar_select %p33, %s32, 0
      %s35 = smul.u32 2, %s34
      %37 = vsyncadd [#allocation6], 0
      %s38 = smul.addr %s35, 8
      %s39 = scalar_lea.hbm %s1, %s38
      %s40 = sshll.u32 %s39, 4
      %s41 = int_to_ptr.hbm [resolvable:$true] %s40
      %s42 = sshll.u32 [#allocation5], 4
      %s43 = int_to_ptr.vmem [resolvable:$true] %s42
      %48 = dma.hbm_to_vmem [thread:$0]  %s41, 256, %s43, [#allocation6], 128, 128, 8
    $region9: #{tpu_custom_call.1} parent=1 // pred_fallthru
      _
    // Predicated region
    $region10: #{tpu_custom_call.1} parent=1 // pred_check
      _
    $region11: #{tpu_custom_call.1} parent=1 // pred_check_branch
      %50 = sbr.rel (0) target = $region13
    $region12: #{tpu_custom_call.1} parent=1 // pred_region
      %s51 = sadd.s32 0, 0
      %p52 = scmp.lt.s32.totalorder %s51, 0
      %s53 = scalar_select %p52, %s51, 0
      %s54 = smul.u32 2, %s53
      %56 = vsyncadd [#allocation6], 0
      %s57 = smul.addr %s54, 8
      %s58 = scalar_lea.hbm %s2, %s57
      %s59 = sshll.u32 %s58, 4
      %s60 = int_to_ptr.hbm [resolvable:$true] %s59
      %s61 = sshll.u32 [#allocation7], 4
      %s62 = int_to_ptr.vmem [resolvable:$true] %s61
      %67 = dma.hbm_to_vmem [thread:$0]  %s60, 256, %s62, [#allocation6], 128, 128, 8
    $region13: #{tpu_custom_call.1} parent=1 // pred_fallthru
      _
    // Predicated region
    $region14: #{tpu_custom_call.1} parent=1 // pred_check
      _
    $region15: #{tpu_custom_call.1} parent=1 // pred_check_branch
      %69 = sbr.rel (0) target = $region17
    $region16: #{tpu_custom_call.1} parent=1 // pred_region
      %71 = dma.done [#allocation3], 256
    $region17: #{tpu_custom_call.1} parent=1 // pred_fallthru
      _
    // Predicated region
    $region18: #{tpu_custom_call.1} parent=1 // pred_check
      _
    $region19: #{tpu_custom_call.1} parent=1 // pred_check_branch
      %73 = sbr.rel (0) target = $region21
    $region20: #{tpu_custom_call.1} parent=1 // pred_region
      %75 = dma.done [#allocation6], 256
    $region21: #{tpu_custom_call.1} parent=1 // pred_fallthru
      _
    // Predicated region
    $region22: #{tpu_custom_call.1} parent=1 // pred_check
      _
    $region23: #{tpu_custom_call.1} parent=1 // pred_check_branch
      %77 = sbr.rel (0) target = $region25
    $region24: #{tpu_custom_call.1} parent=1 // pred_region
      %79 = dma.done [#allocation6], 256
    $region25: #{tpu_custom_call.1} parent=1 // pred_fallthru
      _
    %s80 = sadd.s32 0, 0
    %p81 = scmp.lt.s32.totalorder %s80, 0
    %s82 = scalar_select %p81, %s80, 0
    %s83 = smul.u32 2, %s82
    %s84 = sadd.s32 0, 0
    %p85 = scmp.lt.s32.totalorder %s84, 0
    %s86 = scalar_select %p85, %s84, 0
    %s87 = smul.u32 2, %s86
    %s88 = sadd.s32 0, 0
    %p89 = scmp.lt.s32.totalorder %s88, 0
    %s90 = scalar_select %p89, %s88, 0
    %s91 = smul.u32 2, %s90
    %p92 = scmp.eq.s32.totalorder 0, 0
    // Predicated region
    $region26: #{tpu_custom_call.1} parent=1 // pred_check
      %p93 = pneg %p92
    $region27: #{tpu_custom_call.1} parent=1 // pred_check_branch
      %95 = sbr.rel (%p93) target = $region29
    $region28: #{tpu_custom_call.1} parent=1 // pred_region
      %96 = vst [vmem:[#allocation8] sm:$0xff] 0.0
    $region29: #{tpu_custom_call.1} parent=1 // pred_fallthru
      _
    %v97 = vld [vmem:[#allocation2] sm:$0xff]
    %v98 = vld [vmem:[#allocation2 + $0x8] sm:$0xff]
    %v99 = vld [vmem:[#allocation5] sm:$0xff]
    %v100 = vld [vmem:[#allocation5 + $0x8] sm:$0xff]
    %v101 = vld [vmem:[#allocation7] sm:$0xff]
    %v102 = vld [vmem:[#allocation7 + $0x8] sm:$0xff]
    %v103 = vmul.f32 %v99, -0.5
    %v104 = vmul.f32 %v100, -0.5
    %v105 = vadd.f32 %v97, 1e-08
    %v106 = vadd.f32 %v98, 1e-08
    %v107 = vlog2.pop %v105
    %v108 = vmul.f32 %v107, 0.6931472
    %v109 = vlog2.pop %v106
    %v110 = vmul.f32 %v109, 0.6931472
    %v111 = vmul.f32 %v103, %v108
    %v112 = vmul.f32 %v104, %v110
    %v113 = vmul.f32 %v101, 0.5
    %v114 = vmul.f32 %v102, 0.5
    %v115 = vsub.f32 1.0, %v99
    %v116 = vsub.f32 1.0, %v100
    %v117 = vmul.f32 %v113, %v115
    %v118 = vmul.f32 %v114, %v116
    %v119 = vsub.f32 1.0, %v97
    %v120 = vsub.f32 1.0, %v98
    %v121 = vadd.f32 %v119, 1e-08
    %v122 = vadd.f32 %v120, 1e-08
    %v123 = vlog2.pop %v121
    %v124 = vmul.f32 %v123, 0.6931472
    %v125 = vlog2.pop %v122
    %v126 = vmul.f32 %v125, 0.6931472
    %v127 = vmul.f32 %v117, %v124
    %v128 = vmul.f32 %v118, %v126
    %v129 = vsub.f32 %v111, %v127
    %v130 = vsub.f32 %v112, %v128
    %v131 = vld [vmem:[#allocation8] sm:$0xff]
    %v132 = vadd.f32 %v129, %v130
    %v133 = vadd.f32 %v131, %v132
    %134 = vst [vmem:[#allocation8] sm:$0xff] %v133
    // Predicated region
    $region30: #{tpu_custom_call.1} parent=1 // pred_check
      _
    $region31: #{tpu_custom_call.1} parent=1 // pred_check_branch
      %136 = sbr.rel (0) target = $region33
    $region32: #{tpu_custom_call.1} parent=1 // pred_region
      %138 = vsyncadd [#allocation4], 0
      %s140 = sshll.u32 [#allocation8], 4
      %s141 = int_to_ptr.vmem [resolvable:$true] %s140
      %s142 = sshll.u32 %s3, 4
      %s143 = int_to_ptr.hbm [resolvable:$true] %s142
      %145 = dma.vmem_to_hbm [thread:$0]  %s141, 128, %s143, [#allocation4]
    $region33: #{tpu_custom_call.1} parent=1 // pred_fallthru
      _
    // Predicated region
    $region34: #{tpu_custom_call.1} parent=1 // pred_check
      _
    $region35: #{tpu_custom_call.1} parent=1 // pred_check_branch
      %147 = sbr.rel (0) target = $region37
    $region36: #{tpu_custom_call.1} parent=1 // pred_region
      %149 = dma.done [#allocation4], 128
    $region37: #{tpu_custom_call.1} parent=1 // pred_fallthru
      _
    %150 = vsyncpa [#allocation3], 1
    %151 = vsyncpa [#allocation6], 1
    %152 = vsyncpa [#allocation4], 1

</llo_original>
